<compile_context>
chip_gen: v7x
topology: tpu7x:2x2x1
jax: 0.10.0
libtpu: 0.0.40
codegen_flags: <defaults>
</compile_context>

<pallas_src>
import functools

import jax
import jax.numpy as jnp
import numpy as np
from jax.experimental import pallas as pl
from jax.experimental.pallas import tpu as pltpu


# --------------------------------------------------------------------------
# Pallas kernel (feature-major): fused block-diagonal projection + token-0
# attention row + 2-layer MLP, vectorized over a tile of lane columns.
# --------------------------------------------------------------------------
def _context_mlp_kernel(x_ref, wbig_ref, w0a_ref, b0_ref, w1_ref, b1_ref,
                        out_ref, *, d, h):
    x = x_ref[...]                                   # (3D, TM) feature-major

    # One fused matmul:  w_big (7D+H, 3D) @ x (3D, TM)
    #   rows 0..D-1   : (Wq*scale) @ t0      (scale folded into Wq)
    #   rows D..3D-1  : Wk @ t0, Wv @ t0
    #   rows 3D..5D-1 : Wk @ t1, Wv @ t1     (negative prototype)
    #   rows 5D..7D-1 : Wk @ t2, Wv @ t2     (positive prototype)
    #   rows 7D..7D+H : W0b @ t0             (MLP layer-0 "orig" half)
    proj = jnp.dot(wbig_ref[...], x, preferred_element_type=jnp.float32)

    q0 = proj[0 * d:1 * d]
    k0 = proj[1 * d:2 * d]
    v0 = proj[2 * d:3 * d]
    k1 = proj[3 * d:4 * d]
    v1 = proj[4 * d:5 * d]
    k2 = proj[5 * d:6 * d]
    v2 = proj[6 * d:7 * d]
    h_orig = proj[7 * d:7 * d + h]                   # (H, TM)

    # Attention scores of token 0 vs the 3 tokens; lane-dense (1, TM) vregs.
    s0 = jnp.sum(q0 * k0, axis=0, keepdims=True)
    s1 = jnp.sum(q0 * k1, axis=0, keepdims=True)
    s2 = jnp.sum(q0 * k2, axis=0, keepdims=True)
    m = jnp.maximum(jnp.maximum(s0, s1), s2)
    e0 = jnp.exp(s0 - m)
    e1 = jnp.exp(s1 - m)
    e2 = jnp.exp(s2 - m)
    inv = 1.0 / (e0 + e1 + e2)                       # exact: keeps 1e-4 validation
    attn0 = (e0 * inv) * v0 + (e1 * inv) * v1 + (e2 * inv) * v2   # (D, TM)
    # TODO(synk): attention_dropout / projection_dropout are identity in eval
    # mode and intentionally not emulated.

    # MLP: W0a @ attn0 + (W0b @ t0 from the fused matmul) + b0, LeakyReLU, W1.
    hid = jnp.dot(w0a_ref[...], attn0, preferred_element_type=jnp.float32)
    hid = hid + h_orig + b0_ref[...]
    hid = jnp.where(hid >= 0, hid, 0.01 * hid)        # LeakyReLU(0.01)
    out = jnp.dot(w1_ref[...], hid, preferred_element_type=jnp.float32) + b1_ref[...]
    out_ref[...] = out.astype(out_ref.dtype)


def _choose_grid(m_rows, target_cols=4096):
    """Pick (column_tile, padded_cols). Tile is a multiple of 128; whenever
    more than one 128-column block is needed, use an EVEN number of grid
    steps so v7x's 2 TensorCores split the 'parallel' axis evenly."""
    n128 = -(-max(m_rows, 1) // 128)                 # ceil to 128-lane blocks
    if n128 <= 1:
        return 128, 128                              # single step
    steps = max(2, -(-(n128 * 128) // target_cols))  # ceil(cols / target)
    if steps % 2:
        steps += 1
    tile = (-(-n128 // steps)) * 128
    return tile, steps * tile


def prepare_context_mlp_params(params):
    """One-time weight prep (hoisted out of the per-call path): fold the
    softmax scale into Wq, build the block-diagonal fused projection weight,
    split W0, reshape biases to (H, 1) for feature-major broadcasting."""
    w_qkv, w0, b0, w1, b1 = (params["w_qkv"], params["w0"], params["b0"],
                             params["w1"], params["b1"])
    d = w_qkv.shape[1]
    h = w0.shape[0]
    scale = float(d) ** (-0.5)                       # head_dim ** -0.5, 1 head
    wq = w_qkv[0:d] * scale
    wk = w_qkv[d:2 * d]
    wv = w_qkv[2 * d:3 * d]
    w0a = w0[:, :d]
    w0b = w0[:, d:2 * d]
    z = jnp.zeros((d, d), jnp.float32)
    zh = jnp.zeros((h, d), jnp.float32)
    w_big = jnp.concatenate([
        jnp.concatenate([wq, z, z], axis=1),
        jnp.concatenate([wk, z, z], axis=1),
        jnp.concatenate([wv, z, z], axis=1),
        jnp.concatenate([z, wk, z], axis=1),
        jnp.concatenate([z, wv, z], axis=1),
        jnp.concatenate([z, z, wk], axis=1),
        jnp.concatenate([z, z, wv], axis=1),
        jnp.concatenate([w0b, zh, zh], axis=1),
    ], axis=0)                                        # (7D+H, 3D)
    return {
        "w_big": w_big,
        "w0a": w0a,
        "b0": b0.reshape(h, 1),
        "w1": w1,
        "b1": b1.reshape(h, 1),
        "d": d,
        "h": h,
    }


def context_mlp_forward(s_emb, q_emb, prepared, *, target_cols=4096):
    """Pallas-backed ContextMLP.forward (pre_fc=0, num_layers=2, eval mode)."""
    d, h = prepared["d"], prepared["h"]
    n_support = s_emb.shape[0]
    n_query = q_emb.shape[0]
    slots = n_support + 1
    n_shot = n_support // 2

    # ---- glue (pure JAX): all_emb, prototypes, fused feature-major slab ----
    s_rep = jnp.broadcast_to(s_emb[None], (n_query, n_support, d))
    all_emb = jnp.concatenate([s_rep, q_emb[:, None, :]], axis=1)  # (q,S,D)
    neg = all_emb[:, :n_shot].mean(axis=1)                          # (q,D)
    pos = all_emb[:, n_shot:2 * n_shot].mean(axis=1)                # (q,D)

    # TODO(synk): for very large n_query*n_support the replicated prototype /
    # support streams could be deduplicated with a per-query index_map instead
    # of materializing them; irrelevant at these (overhead-bound) sizes.
    fused = jnp.concatenate([
        all_emb,
        jnp.broadcast_to(neg[:, None, :], (n_query, slots, d)),
        jnp.broadcast_to(pos[:, None, :], (n_query, slots, d)),
    ], axis=-1)                                       # (q, slots, 3D)

    m_rows = n_query * slots
    x_fm = fused.reshape(m_rows, 3 * d).T             # (3D, m_rows)
    tile, m_pad = _choose_grid(m_rows, target_cols)
    x_fm = jnp.pad(x_fm, ((0, 0), (0, m_pad - m_rows)))
    grid = m_pad // tile

    flops = int(2 * m_pad * (3 * d * (7 * d + h) + d * h + h * h)
                + 30 * m_pad * d)
    bytes_accessed = int(4 * (x_fm.size + m_pad * h + prepared["w_big"].size
                              + d * h + h * h + 2 * h))

    def full2d(arr):
        return pl.BlockSpec(arr.shape, lambda i: (0, 0))

    out = pl.pallas_call(
        functools.partial(_context_mlp_kernel, d=d, h=h),
        out_shape=jax.ShapeDtypeStruct((h, m_pad), jnp.float32),
        grid_spec=pltpu.PrefetchScalarGridSpec(
            num_scalar_prefetch=0,
            grid=(grid,),
            in_specs=[
                pl.BlockSpec((3 * d, tile), lambda i: (0, i)),   # fused tokens
                full2d(prepared["w_big"]),                       # (7D+H, 3D)
                full2d(prepared["w0a"]),                         # (H, D)
                full2d(prepared["b0"]),                          # (H, 1)
                full2d(prepared["w1"]),                          # (H, H)
                full2d(prepared["b1"]),                          # (H, 1)
            ],
            out_specs=pl.BlockSpec((h, tile), lambda i: (0, i)),
        ),
        compiler_params=pltpu.CompilerParams(
            dimension_semantics=("parallel",)),
        cost_estimate=pl.CostEstimate(flops=flops,
                                      transcendentals=3 * m_pad,
                                      bytes_accessed=bytes_accessed),
    )(x_fm, prepared["w_big"], prepared["w0a"], prepared["b0"],
      prepared["w1"], prepared["b1"])

    all_out = out[:, :m_rows].T.reshape(n_query, slots, h)
    return all_out, None


# --------------------------------------------------------------------------
# Pure-JAX reference following the PyTorch code literally (for validation).
# --------------------------------------------------------------------------
def reference_forward(s_emb, q_emb, params):
    w_qkv, w0, b0, w1, b1 = (params["w_qkv"], params["w0"], params["b0"],
                             params["w1"], params["b1"])
    n_support, d = s_emb.shape
    n_query = q_emb.shape[0]
    s_rep = jnp.broadcast_to(s_emb[None], (n_query, n_support, d))
    all_emb = jnp.concatenate([s_rep, q_emb[:, None, :]], axis=1)
    orig = all_emb
    n_shot = n_support // 2
    neg = jnp.broadcast_to(all_emb[:, :n_shot].mean(1)[:, None], all_emb.shape)
    pos = jnp.broadcast_to(all_emb[:, n_shot:2 * n_shot].mean(1)[:, None],
                           all_emb.shape)
    stacked = jnp.stack([all_emb, neg, pos], axis=-2)        # (q, S, 3, D)
    qn, S, N, D = stacked.shape
    x = stacked.reshape(qn * S, N, D)
    qkv = (x @ w_qkv.T).reshape(qn * S, N, 3, 1, D).transpose(2, 0, 3, 1, 4)
    qh, kh, vh = qkv[0], qkv[1], qkv[2]
    attn = (qh @ jnp.swapaxes(kh, -2, -1)) * (D ** -0.5)
    attn = jax.nn.softmax(attn, axis=-1)
    xo = jnp.swapaxes(attn @ vh, 1, 2).reshape(qn * S, N, D)
    attn_x = xo.reshape(qn, S, N, D)
    all_out = jnp.concatenate([attn_x[:, :, 0], orig], axis=-1)
    h = all_out @ w0.T + b0
    h = jnp.where(h >= 0, h, 0.01 * h)
    h = h @ w1.T + b1
    return h


def _make_params(key, d, h):
    ks = jax.random.split(key, 5)
    return {
        "w_qkv": 0.1 * jax.random.normal(ks[0], (3 * d, d), dtype=jnp.float32),
        "w0": 0.1 * jax.random.normal(ks[1], (h, 2 * d), dtype=jnp.float32),
        "b0": 0.1 * jax.random.normal(ks[2], (h,), dtype=jnp.float32),
        "w1": 0.1 * jax.random.normal(ks[3], (h, h), dtype=jnp.float32),
        "b1": 0.1 * jax.random.normal(ks[4], (h,), dtype=jnp.float32),
    }


if __name__ == "__main__":
    # Config: inp_dim=32, hidden_dim=32, num_layers=2, pre_fc=0, ctx_head=1
    D, H = 32, 32
    key = jax.random.PRNGKey(0)
    k_param, k_a, k_b = jax.random.split(key, 3)
    params = _make_params(k_param, D, H)
    prepared = prepare_context_mlp_params(params)     # one-time weight prep

    # Two shapes: tiny (n_support=4, n_query=2) and one that exercises a
    # multi-step (even) grid: n_support=10, n_query=16 -> 176 rows -> 2 steps.
    for (n_support, n_query), kk in (((4, 2), k_a), ((10, 16), k_b)):
        ks_, kq_ = jax.random.split(kk)
        s_emb = jax.random.normal(ks_, (n_support, D), dtype=jnp.float32)
        q_emb = jax.random.normal(kq_, (n_query, D), dtype=jnp.float32)

        out, _ = context_mlp_forward(s_emb, q_emb, prepared)
        out = jax.block_until_ready(out)

        ref = reference_forward(s_emb, q_emb, params)
        np.testing.assert_allclose(np.asarray(out), np.asarray(ref),
                                   rtol=1e-4, atol=1e-4)

    print("KERNEL_OK")
</pallas_src>

<mosaic_0001>
module attributes {stable_mosaic.version = 11 : i64} {
  func.func @_context_mlp_kernel(%arg0: i32, %arg1: memref<96x128xf32, #tpu.memory_space<vmem>>, %arg2: memref<256x96xf32, #tpu.memory_space<vmem>>, %arg3: memref<32x32xf32, #tpu.memory_space<vmem>>, %arg4: memref<32x1xf32, #tpu.memory_space<vmem>>, %arg5: memref<32x32xf32, #tpu.memory_space<vmem>>, %arg6: memref<32x1xf32, #tpu.memory_space<vmem>>, %arg7: memref<32x128xf32, #tpu.memory_space<vmem>>) attributes {dimension_semantics = [#tpu.dimension_semantics<parallel>], iteration_bounds = array<i64: 1>, scalar_prefetch = 0 : i64, scratch_operands = 0 : i64, tpu.core_type = #tpu.core_type<tc>, window_params = [{transform_indices = @transform_0, window_bounds = array<i64: 96, 128>}, {pipeline_mode = #tpu.pipeline_mode<synchronous>, transform_indices = @transform_1, window_bounds = array<i64: 256, 96>}, {pipeline_mode = #tpu.pipeline_mode<synchronous>, transform_indices = @transform_2, window_bounds = array<i64: 32, 32>}, {pipeline_mode = #tpu.pipeline_mode<synchronous>, transform_indices = @transform_3, window_bounds = array<i64: 32, 1>}, {pipeline_mode = #tpu.pipeline_mode<synchronous>, transform_indices = @transform_4, window_bounds = array<i64: 32, 32>}, {pipeline_mode = #tpu.pipeline_mode<synchronous>, transform_indices = @transform_5, window_bounds = array<i64: 32, 1>}, {transform_indices = @transform_6, window_bounds = array<i64: 32, 128>}]} {
    %c0 = arith.constant 0 : index
    %c0_0 = arith.constant 0 : index
    %0 = vector.load %arg1[%c0, %c0_0] : memref<96x128xf32, #tpu.memory_space<vmem>>, vector<96x128xf32>
    %c0_1 = arith.constant 0 : index
    %c0_2 = arith.constant 0 : index
    %1 = vector.load %arg2[%c0_1, %c0_2] : memref<256x96xf32, #tpu.memory_space<vmem>>, vector<256x96xf32>
    %cst = arith.constant dense<0.000000e+00> : vector<256x128xf32>
    %2 = tpu.matmul %1, %0, %cst {dimension_numbers = #tpu.dot_dimension_numbers<[1], [0], [0], [1], [0, 0, 1, 1], [], []>} : vector<256x96xf32>, vector<96x128xf32>, vector<256x128xf32> -> vector<256x128xf32>
    %3 = vector.extract_strided_slice %2 {offsets = [0, 0], sizes = [32, 128], strides = [1, 1]} : vector<256x128xf32> to vector<32x128xf32>
    %4 = vector.extract_strided_slice %2 {offsets = [32, 0], sizes = [32, 128], strides = [1, 1]} : vector<256x128xf32> to vector<32x128xf32>
    %5 = vector.extract_strided_slice %2 {offsets = [64, 0], sizes = [32, 128], strides = [1, 1]} : vector<256x128xf32> to vector<32x128xf32>
    %6 = vector.extract_strided_slice %2 {offsets = [96, 0], sizes = [32, 128], strides = [1, 1]} : vector<256x128xf32> to vector<32x128xf32>
    %7 = vector.extract_strided_slice %2 {offsets = [128, 0], sizes = [32, 128], strides = [1, 1]} : vector<256x128xf32> to vector<32x128xf32>
    %8 = vector.extract_strided_slice %2 {offsets = [160, 0], sizes = [32, 128], strides = [1, 1]} : vector<256x128xf32> to vector<32x128xf32>
    %9 = vector.extract_strided_slice %2 {offsets = [192, 0], sizes = [32, 128], strides = [1, 1]} : vector<256x128xf32> to vector<32x128xf32>
    %10 = vector.extract_strided_slice %2 {offsets = [224, 0], sizes = [32, 128], strides = [1, 1]} : vector<256x128xf32> to vector<32x128xf32>
    %11 = arith.mulf %3, %4 : vector<32x128xf32>
    %cst_3 = arith.constant dense<0.000000e+00> : vector<128xf32>
    %12 = vector.multi_reduction <add>, %11, %cst_3 [0] : vector<32x128xf32> to vector<128xf32>
    %13 = vector.shape_cast %12 : vector<128xf32> to vector<1x128xf32>
    %14 = arith.mulf %3, %6 : vector<32x128xf32>
    %cst_4 = arith.constant dense<0.000000e+00> : vector<128xf32>
    %15 = vector.multi_reduction <add>, %14, %cst_4 [0] : vector<32x128xf32> to vector<128xf32>
    %16 = vector.shape_cast %15 : vector<128xf32> to vector<1x128xf32>
    %17 = arith.mulf %3, %8 : vector<32x128xf32>
    %cst_5 = arith.constant dense<0.000000e+00> : vector<128xf32>
    %18 = vector.multi_reduction <add>, %17, %cst_5 [0] : vector<32x128xf32> to vector<128xf32>
    %19 = vector.shape_cast %18 : vector<128xf32> to vector<1x128xf32>
    %20 = arith.maximumf %13, %16 : vector<1x128xf32>
    %21 = arith.maximumf %20, %19 : vector<1x128xf32>
    %22 = arith.subf %13, %21 : vector<1x128xf32>
    %23 = math.exp %22 : vector<1x128xf32>
    %24 = arith.subf %16, %21 : vector<1x128xf32>
    %25 = math.exp %24 : vector<1x128xf32>
    %26 = arith.subf %19, %21 : vector<1x128xf32>
    %27 = math.exp %26 : vector<1x128xf32>
    %28 = arith.addf %23, %25 : vector<1x128xf32>
    %29 = arith.addf %28, %27 : vector<1x128xf32>
    %cst_6 = arith.constant 1.000000e+00 : f32
    %30 = vector.broadcast %cst_6 : f32 to vector<1x128xf32>
    %31 = arith.divf %30, %29 : vector<1x128xf32>
    %32 = arith.mulf %23, %31 : vector<1x128xf32>
    %33 = vector.broadcast %32 : vector<1x128xf32> to vector<32x128xf32>
    %34 = arith.mulf %33, %5 : vector<32x128xf32>
    %35 = arith.mulf %25, %31 : vector<1x128xf32>
    %36 = vector.broadcast %35 : vector<1x128xf32> to vector<32x128xf32>
    %37 = arith.mulf %36, %7 : vector<32x128xf32>
    %38 = arith.addf %34, %37 : vector<32x128xf32>
    %39 = arith.mulf %27, %31 : vector<1x128xf32>
    %40 = vector.broadcast %39 : vector<1x128xf32> to vector<32x128xf32>
    %41 = arith.mulf %40, %9 : vector<32x128xf32>
    %42 = arith.addf %38, %41 : vector<32x128xf32>
    %c0_7 = arith.constant 0 : index
    %c0_8 = arith.constant 0 : index
    %43 = vector.load %arg3[%c0_7, %c0_8] : memref<32x32xf32, #tpu.memory_space<vmem>>, vector<32x32xf32>
    %cst_9 = arith.constant dense<0.000000e+00> : vector<32x128xf32>
    %44 = tpu.matmul %43, %42, %cst_9 {dimension_numbers = #tpu.dot_dimension_numbers<[1], [0], [0], [1], [0, 0, 1, 1], [], []>} : vector<32x32xf32>, vector<32x128xf32>, vector<32x128xf32> -> vector<32x128xf32>
    %45 = arith.addf %44, %10 : vector<32x128xf32>
    %c0_10 = arith.constant 0 : index
    %c0_11 = arith.constant 0 : index
    %46 = vector.load %arg4[%c0_10, %c0_11] : memref<32x1xf32, #tpu.memory_space<vmem>>, vector<32x1xf32>
    %47 = vector.broadcast %46 : vector<32x1xf32> to vector<32x128xf32>
    %48 = arith.addf %45, %47 : vector<32x128xf32>
    %cst_12 = arith.constant 0.000000e+00 : f32
    %49 = vector.broadcast %cst_12 : f32 to vector<32x128xf32>
    %50 = arith.cmpf oge, %48, %49 : vector<32x128xf32>
    %cst_13 = arith.constant 0.00999999977 : f32
    %51 = vector.broadcast %cst_13 : f32 to vector<32x128xf32>
    %52 = arith.mulf %51, %48 : vector<32x128xf32>
    %53 = arith.select %50, %48, %52 : vector<32x128xi1>, vector<32x128xf32>
    %c0_14 = arith.constant 0 : index
    %c0_15 = arith.constant 0 : index
    %54 = vector.load %arg5[%c0_14, %c0_15] : memref<32x32xf32, #tpu.memory_space<vmem>>, vector<32x32xf32>
    %cst_16 = arith.constant dense<0.000000e+00> : vector<32x128xf32>
    %55 = tpu.matmul %54, %53, %cst_16 {dimension_numbers = #tpu.dot_dimension_numbers<[1], [0], [0], [1], [0, 0, 1, 1], [], []>} : vector<32x32xf32>, vector<32x128xf32>, vector<32x128xf32> -> vector<32x128xf32>
    %c0_17 = arith.constant 0 : index
    %c0_18 = arith.constant 0 : index
    %56 = vector.load %arg6[%c0_17, %c0_18] : memref<32x1xf32, #tpu.memory_space<vmem>>, vector<32x1xf32>
    %57 = vector.broadcast %56 : vector<32x1xf32> to vector<32x128xf32>
    %58 = arith.addf %55, %57 : vector<32x128xf32>
    %c0_19 = arith.constant 0 : index
    %c0_20 = arith.constant 0 : index
    %59 = vector.load %arg7[%c0_19, %c0_20] : memref<32x128xf32, #tpu.memory_space<vmem>>, vector<32x128xf32>
    tpu.vector_store %arg7[%c0_19, %c0_20], %58 {strides = array<i32>} : memref<32x128xf32, #tpu.memory_space<vmem>>, vector<32x128xf32>,
    return
  }
  func.func @transform_0(%arg0: i32) -> (i32, i32) {
    %c0_i32 = arith.constant 0 : i32
    %c0_i32_0 = arith.constant 0 : i32
    return %c0_i32, %arg0 : i32, i32
  }
  func.func @transform_1(%arg0: i32) -> (i32, i32) {
    %c0_i32 = arith.constant 0 : i32
    %c0_i32_0 = arith.constant 0 : i32
    %c0_i32_1 = arith.constant 0 : i32
    return %c0_i32, %c0_i32_0 : i32, i32
  }
  func.func @transform_2(%arg0: i32) -> (i32, i32) {
    %c0_i32 = arith.constant 0 : i32
    %c0_i32_0 = arith.constant 0 : i32
    %c0_i32_1 = arith.constant 0 : i32
    return %c0_i32, %c0_i32_0 : i32, i32
  }
  func.func @transform_3(%arg0: i32) -> (i32, i32) {
    %c0_i32 = arith.constant 0 : i32
    %c0_i32_0 = arith.constant 0 : i32
    %c0_i32_1 = arith.constant 0 : i32
    return %c0_i32, %c0_i32_0 : i32, i32
  }
  func.func @transform_4(%arg0: i32) -> (i32, i32) {
    %c0_i32 = arith.constant 0 : i32
    %c0_i32_0 = arith.constant 0 : i32
    %c0_i32_1 = arith.constant 0 : i32
    return %c0_i32, %c0_i32_0 : i32, i32
  }
  func.func @transform_5(%arg0: i32) -> (i32, i32) {
    %c0_i32 = arith.constant 0 : i32
    %c0_i32_0 = arith.constant 0 : i32
    %c0_i32_1 = arith.constant 0 : i32
    return %c0_i32, %c0_i32_0 : i32, i32
  }
  func.func @transform_6(%arg0: i32) -> (i32, i32) {
    %c0_i32 = arith.constant 0 : i32
    %c0_i32_0 = arith.constant 0 : i32
    return %c0_i32, %arg0 : i32, i32
  }
}

</mosaic_0001>

<llo_original>
// kernel: tpu_custom_call.1
$region0: #{tpu_custom_call.1}
  #allocation0 [shape = 'u32[]', space=smem, size = 0x4, offset = 0x4, fixed_abs, tag = 'smem constant byte address 0x4 - core index']
  #allocation1 [shape = 'u32[144,128]{1,0:T(1,128)}', space=vmem, size = 0x12000, scoped, tag = 'internal scratch']
  %s0 = inlined_call_operand.vmem [shape: f32[96,128], index: 0, kind: input, shape index: {}]
  %s1 = inlined_call_operand.vmem [shape: f32[256,96], index: 1, kind: input, shape index: {}]
  %s2 = inlined_call_operand.vmem [shape: f32[32,32], index: 2, kind: input, shape index: {}]
  %s3 = inlined_call_operand.vmem [shape: f32[32,1], index: 3, kind: input, shape index: {}]
  %s4 = inlined_call_operand.vmem [shape: f32[32,32], index: 4, kind: input, shape index: {}]
  %s5 = inlined_call_operand.vmem [shape: f32[32,1], index: 5, kind: input, shape index: {}]
  %s6 = inlined_call_operand.hbm [shape: f32[32,128], index: 6, kind: output, shape index: {}]
  %s7 = sld [smem:[#allocation0]]
  $region34: #{tpu_custom_call.1} parent=0
    _
  %s9 = ssub.s32 1, %s7
  %s10 = scalar_select 0, %s9, %s7
  $region1: #{tpu_custom_call.1} parent=0
    #allocation2 [shape = 'u8[16384]{0}', space=vmem, size = 0x4000, scoped, tag = 'output window, operand 0, single buffered']
    #allocation3 [shape = 's32[1]{0}', space=sflag, size = 0x4, scoped, tag = 'scoped memory for tpu_custom_call.1']
    %11 = vsyncpa [#allocation3], 0
    // Predicated region
    $region2: #{tpu_custom_call.1} parent=1 // pred_check
      _
    $region3: #{tpu_custom_call.1} parent=1 // pred_check_branch
      %13 = sbr.rel (0) target = $region5
    $region4: #{tpu_custom_call.1} parent=1 // pred_region
      _
    $region5: #{tpu_custom_call.1} parent=1 // pred_fallthru
      _
    // Predicated region
    $region6: #{tpu_custom_call.1} parent=1 // pred_check
      _
    $region7: #{tpu_custom_call.1} parent=1 // pred_check_branch
      %15 = sbr.rel (0) target = $region9
    $region8: #{tpu_custom_call.1} parent=1 // pred_region
      _
    $region9: #{tpu_custom_call.1} parent=1 // pred_fallthru
      _
    // Predicated region
    $region10: #{tpu_custom_call.1} parent=1 // pred_check
      _
    $region11: #{tpu_custom_call.1} parent=1 // pred_check_branch
      %17 = sbr.rel (0) target = $region13
    $region12: #{tpu_custom_call.1} parent=1 // pred_region
      _
    $region13: #{tpu_custom_call.1} parent=1 // pred_fallthru
      _
    // Predicated region
    $region14: #{tpu_custom_call.1} parent=1 // pred_check
      _
    $region15: #{tpu_custom_call.1} parent=1 // pred_check_branch
      %19 = sbr.rel (0) target = $region17
    $region16: #{tpu_custom_call.1} parent=1 // pred_region
      _
    $region17: #{tpu_custom_call.1} parent=1 // pred_fallthru
      _
    // Predicated region
    $region18: #{tpu_custom_call.1} parent=1 // pred_check
      _
    $region19: #{tpu_custom_call.1} parent=1 // pred_check_branch
      %21 = sbr.rel (0) target = $region21
    $region20: #{tpu_custom_call.1} parent=1 // pred_region
      _
    $region21: #{tpu_custom_call.1} parent=1 // pred_fallthru
      _
    // Predicated region
    $region22: #{tpu_custom_call.1} parent=1 // pred_check
      _
    $region23: #{tpu_custom_call.1} parent=1 // pred_check_branch
      %23 = sbr.rel (0) target = $region25
    $region24: #{tpu_custom_call.1} parent=1 // pred_region
      _
    $region25: #{tpu_custom_call.1} parent=1 // pred_fallthru
      _
    %v24 = vld [vmem:[%s0] sm:$0xff]
    %v25 = vld [vmem:[%s0 + $0x8] sm:$0xff]
    %v26 = vld [vmem:[%s0 + $0x10] sm:$0xff]
    %v27 = vld [vmem:[%s0 + $0x18] sm:$0xff]
    %v28 = vld [vmem:[%s0 + $0x20] sm:$0xff]
    %v29 = vld [vmem:[%s0 + $0x28] sm:$0xff]
    %v30 = vld [vmem:[%s0 + $0x30] sm:$0xff]
    %v31 = vld [vmem:[%s0 + $0x38] sm:$0xff]
    %v32 = vld [vmem:[%s0 + $0x40] sm:$0xff]
    %v33 = vld [vmem:[%s0 + $0x48] sm:$0xff]
    %v34 = vld [vmem:[%s0 + $0x50] sm:$0xff]
    %v35 = vld [vmem:[%s0 + $0x58] sm:$0xff]
    %v36 = vld [vmem:[%s1] sm:$0xff]
    %v37 = vld [vmem:[%s1 + $0x8] sm:$0xff]
    %v38 = vld [vmem:[%s1 + $0x10] sm:$0xff]
    %v39 = vld [vmem:[%s1 + $0x18] sm:$0xff]
    %v40 = vld [vmem:[%s1 + $0x20] sm:$0xff]
    %v41 = vld [vmem:[%s1 + $0x28] sm:$0xff]
    %v42 = vld [vmem:[%s1 + $0x30] sm:$0xff]
    %v43 = vld [vmem:[%s1 + $0x38] sm:$0xff]
    %v44 = vld [vmem:[%s1 + $0x40] sm:$0xff]
    %v45 = vld [vmem:[%s1 + $0x48] sm:$0xff]
    %v46 = vld [vmem:[%s1 + $0x50] sm:$0xff]
    %v47 = vld [vmem:[%s1 + $0x58] sm:$0xff]
    %v48 = vld [vmem:[%s1 + $0x60] sm:$0xff]
    %v49 = vld [vmem:[%s1 + $0x68] sm:$0xff]
    %v50 = vld [vmem:[%s1 + $0x70] sm:$0xff]
    %v51 = vld [vmem:[%s1 + $0x78] sm:$0xff]
    %v52 = vld [vmem:[%s1 + $0x80] sm:$0xff]
    %v53 = vld [vmem:[%s1 + $0x88] sm:$0xff]
    %v54 = vld [vmem:[%s1 + $0x90] sm:$0xff]
    %v55 = vld [vmem:[%s1 + $0x98] sm:$0xff]
    %v56 = vld [vmem:[%s1 + $0xa0] sm:$0xff]
    %v57 = vld [vmem:[%s1 + $0xa8] sm:$0xff]
    %v58 = vld [vmem:[%s1 + $0xb0] sm:$0xff]
    %v59 = vld [vmem:[%s1 + $0xb8] sm:$0xff]
    %v60 = vld [vmem:[%s1 + $0xc0] sm:$0xff]
    %v61 = vld [vmem:[%s1 + $0xc8] sm:$0xff]
    %v62 = vld [vmem:[%s1 + $0xd0] sm:$0xff]
    %v63 = vld [vmem:[%s1 + $0xd8] sm:$0xff]
    %v64 = vld [vmem:[%s1 + $0xe0] sm:$0xff]
    %v65 = vld [vmem:[%s1 + $0xe8] sm:$0xff]
    %v66 = vld [vmem:[%s1 + $0xf0] sm:$0xff]
    %v67 = vld [vmem:[%s1 + $0xf8] sm:$0xff]
    %vm68 = vcmask 785408
    %v70 = vsel %vm68, %v36, 0
    %v73 = vsel %vm68, %v37, 0
    %v76 = vsel %vm68, %v38, 0
    %v79 = vsel %vm68, %v39, 0
    %v82 = vsel %vm68, %v40, 0
    %v85 = vsel %vm68, %v41, 0
    %v88 = vsel %vm68, %v42, 0
    %v91 = vsel %vm68, %v43, 0
    %v94 = vsel %vm68, %v44, 0
    %v97 = vsel %vm68, %v45, 0
    %v100 = vsel %vm68, %v46, 0
    %v103 = vsel %vm68, %v47, 0
    %v106 = vsel %vm68, %v48, 0
    %v109 = vsel %vm68, %v49, 0
    %v112 = vsel %vm68, %v50, 0
    %v115 = vsel %vm68, %v51, 0
    %v118 = vsel %vm68, %v52, 0
    %v121 = vsel %vm68, %v53, 0
    %v124 = vsel %vm68, %v54, 0
    %v127 = vsel %vm68, %v55, 0
    %v130 = vsel %vm68, %v56, 0
    %v133 = vsel %vm68, %v57, 0
    %v136 = vsel %vm68, %v58, 0
    %v139 = vsel %vm68, %v59, 0
    %v142 = vsel %vm68, %v60, 0
    %v145 = vsel %vm68, %v61, 0
    %v148 = vsel %vm68, %v62, 0
    %v151 = vsel %vm68, %v63, 0
    %v154 = vsel %vm68, %v64, 0
    %v157 = vsel %vm68, %v65, 0
    %v160 = vsel %vm68, %v66, 0
    %v163 = vsel %vm68, %v67, 0
    %165 = vmatprep.subr.mxu0 0.0
    %166 = vmatpush1.msra.mxu0 %v24
    %167 = vmatprep.subr.mxu0 0.0
    %168 = vmatpush1.msra.mxu0 %v25
    %169 = vmatprep.subr.mxu0 0.0
    %170 = vmatpush1.msra.mxu0 %v26
    %171 = vmatprep.subr.mxu0 0.0
    %172 = vmatpush1.msra.mxu0 %v27
    %173 = vmatprep.subr.mxu0 0.0
    %174 = vmatpush1.msra.mxu0 %v28
    %175 = vmatprep.subr.mxu0 0.0
    %176 = vmatpush1.msra.mxu0 %v29
    %177 = vmatprep.subr.mxu0 0.0
    %178 = vmatpush1.msra.mxu0 %v30
    %179 = vmatprep.subr.mxu0 0.0
    %180 = vmatpush1.msra.mxu0 %v31
    %181 = vmatprep.subr.mxu0 0.0
    %182 = vmatpush1.msra.mxu0 %v32
    %183 = vmatprep.subr.mxu0 0.0
    %184 = vmatpush1.msra.mxu0 %v33
    %185 = vmatprep.subr.mxu0 0.0
    %186 = vmatpush1.msra.mxu0 %v34
    %187 = vmatprep.subr.mxu0 0.0
    %188 = vmatpush1.msra.mxu0 %v35
    %189 = vmatprep.subr.mxu0 0.0
    %190 = vmatpush1.msra.mxu0 0.0
    %191 = vmatprep.subr.mxu0 0.0
    %192 = vmatpush1.msra.mxu0 0.0
    %193 = vmatprep.subr.mxu0 0.0
    %194 = vmatpush1.msra.mxu0 0.0
    %195 = vmatprep.subr.mxu0 0.0
    %196 = vmatpush1.msra.mxu0 0.0
    %197 = vmatprep.subr.mxu0 0.0
    %198 = vmatpush1.msra.mxu0 0.0
    %199 = vmatprep.subr.mxu0 0.0
    %200 = vmatpush1.msra.mxu0 0.0
    %201 = vmatprep.subr.mxu0 0.0
    %202 = vmatpush1.msra.mxu0 0.0
    %203 = vmatprep.subr.mxu0 0.0
    %204 = vmatpush1.msra.mxu0 0.0
    %205 = vmatprep.subr.mxu0 0.0
    %206 = vmatpush1.msra.mxu0 0.0
    %207 = vmatprep.subr.mxu0 0.0
    %208 = vmatpush1.msra.mxu0 0.0
    %209 = vmatprep.subr.mxu0 0.0
    %210 = vmatpush1.msra.mxu0 0.0
    %211 = vmatprep.subr.mxu0 0.0
    %212 = vmatpush1.msra.mxu0 0.0
    %213 = vmatprep.subr.mxu0 0.0
    %214 = vmatpush1.msra.mxu0 0.0
    %215 = vmatprep.subr.mxu0 0.0
    %216 = vmatpush1.msra.mxu0 0.0
    %217 = vmatprep.subr.mxu0 0.0
    %218 = vmatpush1.msra.mxu0 0.0
    %219 = vmatprep.subr.mxu0 0.0
    %220 = vmatpush1.msra.mxu0 0.0
    %221 = vmatprep.subr.mxu0 0.0
    %222 = vmatpush1.msra.mxu0 0.0
    %223 = vmatprep.subr.mxu0 0.0
    %224 = vmatpush1.msra.mxu0 0.0
    %225 = vmatprep.subr.mxu0 0.0
    %226 = vmatpush1.msra.mxu0 0.0
    %227 = vmatprep.subr.mxu0 0.0
    %228 = vmatpush1.msra.mxu0 0.0
    %229 = vmatprep.mubr.f32.mxu0 0.0
    %230 = vmatmul.mubr.f32.gmra.mrb[0].mxu0 %v70
    %v231 = vpop.f32.mrb[0].mxu0
    %v232 = vadd.f32 0.0, %v231
    %v233 = vpop.f32.mrb[0].mxu0
    %234 = vmatprep.mubr.f32.mxu0 0.0
    %235 = vmatmul.mubr.f32.gmra.mrb[0].mxu0 %v73
    %v236 = vpop.f32.mrb[0].mxu0
    %v237 = vadd.f32 0.0, %v236
    %v238 = vpop.f32.mrb[0].mxu0
    %239 = vmatprep.mubr.f32.mxu0 0.0
    %240 = vmatmul.mubr.f32.gmra.mrb[0].mxu0 %v76
    %v241 = vpop.f32.mrb[0].mxu0
    %v242 = vadd.f32 0.0, %v241
    %v243 = vpop.f32.mrb[0].mxu0
    %244 = vmatprep.mubr.f32.mxu0 0.0
    %245 = vmatmul.mubr.f32.gmra.mrb[0].mxu0 %v79
    %v246 = vpop.f32.mrb[0].mxu0
    %v247 = vadd.f32 0.0, %v246
    %v248 = vpop.f32.mrb[0].mxu0
    %249 = vmatprep.mubr.f32.mxu0 0.0
    %250 = vmatmul.mubr.f32.gmra.mrb[0].mxu0 %v82
    %v251 = vpop.f32.mrb[0].mxu0
    %v252 = vadd.f32 0.0, %v251
    %v253 = vpop.f32.mrb[0].mxu0
    %254 = vmatprep.mubr.f32.mxu0 0.0
    %255 = vmatmul.mubr.f32.gmra.mrb[0].mxu0 %v85
    %v256 = vpop.f32.mrb[0].mxu0
    %v257 = vadd.f32 0.0, %v256
    %v258 = vpop.f32.mrb[0].mxu0
    %259 = vmatprep.mubr.f32.mxu0 0.0
    %260 = vmatmul.mubr.f32.gmra.mrb[0].mxu0 %v88
    %v261 = vpop.f32.mrb[0].mxu0
    %v262 = vadd.f32 0.0, %v261
    %v263 = vpop.f32.mrb[0].mxu0
    %264 = vmatprep.mubr.f32.mxu0 0.0
    %265 = vmatmul.mubr.f32.gmra.mrb[0].mxu0 %v91
    %v266 = vpop.f32.mrb[0].mxu0
    %v267 = vadd.f32 0.0, %v266
    %v268 = vpop.f32.mrb[0].mxu0
    %269 = vmatprep.mubr.f32.mxu0 0.0
    %270 = vmatmul.mubr.f32.gmra.mrb[0].mxu0 %v94
    %v271 = vpop.f32.mrb[0].mxu0
    %v272 = vadd.f32 0.0, %v271
    %v273 = vpop.f32.mrb[0].mxu0
    %274 = vmatprep.mubr.f32.mxu0 0.0
    %275 = vmatmul.mubr.f32.gmra.mrb[0].mxu0 %v97
    %v276 = vpop.f32.mrb[0].mxu0
    %v277 = vadd.f32 0.0, %v276
    %v278 = vpop.f32.mrb[0].mxu0
    %279 = vmatprep.mubr.f32.mxu0 0.0
    %280 = vmatmul.mubr.f32.gmra.mrb[0].mxu0 %v100
    %v281 = vpop.f32.mrb[0].mxu0
    %v282 = vadd.f32 0.0, %v281
    %v283 = vpop.f32.mrb[0].mxu0
    %284 = vmatprep.mubr.f32.mxu0 0.0
    %285 = vmatmul.mubr.f32.gmra.mrb[0].mxu0 %v103
    %v286 = vpop.f32.mrb[0].mxu0
    %v287 = vadd.f32 0.0, %v286
    %v288 = vpop.f32.mrb[0].mxu0
    %289 = vmatprep.mubr.f32.mxu0 0.0
    %290 = vmatmul.mubr.f32.gmra.mrb[0].mxu0 %v106
    %v291 = vpop.f32.mrb[0].mxu0
    %v292 = vadd.f32 0.0, %v291
    %v293 = vpop.f32.mrb[0].mxu0
    %294 = vmatprep.mubr.f32.mxu0 0.0
    %295 = vmatmul.mubr.f32.gmra.mrb[0].mxu0 %v109
    %v296 = vpop.f32.mrb[0].mxu0
    %v297 = vadd.f32 0.0, %v296
    %v298 = vpop.f32.mrb[0].mxu0
    %299 = vmatprep.mubr.f32.mxu0 0.0
    %300 = vmatmul.mubr.f32.gmra.mrb[0].mxu0 %v112
    %v301 = vpop.f32.mrb[0].mxu0
    %v302 = vadd.f32 0.0, %v301
    %v303 = vpop.f32.mrb[0].mxu0
    %304 = vmatprep.mubr.f32.mxu0 0.0
    %305 = vmatmul.mubr.f32.gmra.mrb[0].mxu0 %v115
    %v306 = vpop.f32.mrb[0].mxu0
    %v307 = vadd.f32 0.0, %v306
    %v308 = vpop.f32.mrb[0].mxu0
    %309 = vmatprep.mubr.f32.mxu0 0.0
    %310 = vmatmul.mubr.f32.gmra.mrb[0].mxu0 %v118
    %v311 = vpop.f32.mrb[0].mxu0
    %v312 = vadd.f32 0.0, %v311
    %v313 = vpop.f32.mrb[0].mxu0
    %314 = vmatprep.mubr.f32.mxu0 0.0
    %315 = vmatmul.mubr.f32.gmra.mrb[0].mxu0 %v121
    %v316 = vpop.f32.mrb[0].mxu0
    %v317 = vadd.f32 0.0, %v316
    %v318 = vpop.f32.mrb[0].mxu0
    %319 = vmatprep.mubr.f32.mxu0 0.0
    %320 = vmatmul.mubr.f32.gmra.mrb[0].mxu0 %v124
    %v321 = vpop.f32.mrb[0].mxu0
    %v322 = vadd.f32 0.0, %v321
    %v323 = vpop.f32.mrb[0].mxu0
    %324 = vmatprep.mubr.f32.mxu0 0.0
    %325 = vmatmul.mubr.f32.gmra.mrb[0].mxu0 %v127
    %v326 = vpop.f32.mrb[0].mxu0
    %v327 = vadd.f32 0.0, %v326
    %v328 = vpop.f32.mrb[0].mxu0
    %329 = vmatprep.mubr.f32.mxu0 0.0
    %330 = vmatmul.mubr.f32.gmra.mrb[0].mxu0 %v130
    %v331 = vpop.f32.mrb[0].mxu0
    %v332 = vadd.f32 0.0, %v331
    %v333 = vpop.f32.mrb[0].mxu0
    %334 = vmatprep.mubr.f32.mxu0 0.0
    %335 = vmatmul.mubr.f32.gmra.mrb[0].mxu0 %v133
    %v336 = vpop.f32.mrb[0].mxu0
    %v337 = vadd.f32 0.0, %v336
    %v338 = vpop.f32.mrb[0].mxu0
    %339 = vmatprep.mubr.f32.mxu0 0.0
    %340 = vmatmul.mubr.f32.gmra.mrb[0].mxu0 %v136
    %v341 = vpop.f32.mrb[0].mxu0
    %v342 = vadd.f32 0.0, %v341
    %v343 = vpop.f32.mrb[0].mxu0
    %344 = vmatprep.mubr.f32.mxu0 0.0
    %345 = vmatmul.mubr.f32.gmra.mrb[0].mxu0 %v139
    %v346 = vpop.f32.mrb[0].mxu0
    %v347 = vadd.f32 0.0, %v346
    %v348 = vpop.f32.mrb[0].mxu0
    %349 = vmatprep.mubr.f32.mxu0 0.0
    %350 = vmatmul.mubr.f32.gmra.mrb[0].mxu0 %v142
    %v351 = vpop.f32.mrb[0].mxu0
    %v352 = vadd.f32 0.0, %v351
    %v353 = vpop.f32.mrb[0].mxu0
    %354 = vmatprep.mubr.f32.mxu0 0.0
    %355 = vmatmul.mubr.f32.gmra.mrb[0].mxu0 %v145
    %v356 = vpop.f32.mrb[0].mxu0
    %v357 = vadd.f32 0.0, %v356
    %v358 = vpop.f32.mrb[0].mxu0
    %359 = vmatprep.mubr.f32.mxu0 0.0
    %360 = vmatmul.mubr.f32.gmra.mrb[0].mxu0 %v148
    %v361 = vpop.f32.mrb[0].mxu0
    %v362 = vadd.f32 0.0, %v361
    %v363 = vpop.f32.mrb[0].mxu0
    %364 = vmatprep.mubr.f32.mxu0 0.0
    %365 = vmatmul.mubr.f32.gmra.mrb[0].mxu0 %v151
    %v366 = vpop.f32.mrb[0].mxu0
    %v367 = vadd.f32 0.0, %v366
    %v368 = vpop.f32.mrb[0].mxu0
    %369 = vmatprep.mubr.f32.mxu0 0.0
    %370 = vmatmul.mubr.f32.gmra.mrb[0].mxu0 %v154
    %v371 = vpop.f32.mrb[0].mxu0
    %v372 = vadd.f32 0.0, %v371
    %v373 = vpop.f32.mrb[0].mxu0
    %374 = vmatprep.mubr.f32.mxu0 0.0
    %375 = vmatmul.mubr.f32.gmra.mrb[0].mxu0 %v157
    %v376 = vpop.f32.mrb[0].mxu0
    %v377 = vadd.f32 0.0, %v376
    %v378 = vpop.f32.mrb[0].mxu0
    %379 = vmatprep.mubr.f32.mxu0 0.0
    %380 = vmatmul.mubr.f32.gmra.mrb[0].mxu0 %v160
    %v381 = vpop.f32.mrb[0].mxu0
    %v382 = vadd.f32 0.0, %v381
    %v383 = vpop.f32.mrb[0].mxu0
    %384 = vmatprep.mubr.f32.mxu0 0.0
    %385 = vmatmul.mubr.f32.gmra.mrb[0].mxu0 %v163
    %v386 = vpop.f32.mrb[0].mxu0
    %v387 = vadd.f32 0.0, %v386
    %v388 = vpop.f32.mrb[0].mxu0
    %389 = vdwg.mxu0
    %v390 = vmul.f32 %v232, %v252
    %v391 = vmul.f32 %v237, %v257
    %v392 = vmul.f32 %v242, %v262
    %v393 = vmul.f32 %v247, %v267
    %v394 = vadd.f32 %v390, %v391
    %v395 = vadd.f32 %v394, %v392
    %v396 = vadd.f32 %v395, %v393
    %v397 = vrot.slane %v396, 4
    %v398 = vadd.f32 %v396, %v397
    %v399 = vrot.slane %v398, 2
    %v400 = vadd.f32 %v398, %v399
    %v401 = vrot.slane %v400, 1
    %v402 = vadd.f32 %v400, %v401
    %v403 = vmul.f32 %v232, %v292
    %v404 = vmul.f32 %v237, %v297
    %v405 = vmul.f32 %v242, %v302
    %v406 = vmul.f32 %v247, %v307
    %v407 = vadd.f32 %v403, %v404
    %v408 = vadd.f32 %v407, %v405
    %v409 = vadd.f32 %v408, %v406
    %v410 = vrot.slane %v409, 4
    %v411 = vadd.f32 %v409, %v410
    %v412 = vrot.slane %v411, 2
    %v413 = vadd.f32 %v411, %v412
    %v414 = vrot.slane %v413, 1
    %v415 = vadd.f32 %v413, %v414
    %v416 = vmul.f32 %v232, %v332
    %v417 = vmul.f32 %v237, %v337
    %v418 = vmul.f32 %v242, %v342
    %v419 = vmul.f32 %v247, %v347
    %v420 = vadd.f32 %v416, %v417
    %v421 = vadd.f32 %v420, %v418
    %v422 = vadd.f32 %v421, %v419
    %v423 = vrot.slane %v422, 4
    %v424 = vadd.f32 %v422, %v423
    %v425 = vrot.slane %v424, 2
    %v426 = vadd.f32 %v424, %v425
    %v427 = vrot.slane %v426, 1
    %v428 = vadd.f32 %v426, %v427
    %v429 = vmax.f32 %v402, %v415
    %v430 = vmax.f32 %v429, %v428
    %v431 = vsub.f32 %v402, %v430
    %v432 = vmul.f32 %v431, 1.442695
    %v433 = vpow.pop %v432
    %v434 = vsub.f32 %v415, %v430
    %v435 = vmul.f32 %v434, 1.442695
    %v436 = vpow.pop %v435
    %v437 = vsub.f32 %v428, %v430
    %v438 = vmul.f32 %v437, 1.442695
    %v439 = vpow.pop %v438
    %v440 = vadd.f32 %v433, %v436
    %v441 = vadd.f32 %v440, %v439
    %v442 = vrcp.pop %v441
    %v443 = vmul.f32 1.0, %v442
    %v444 = vmul.f32 %v433, %v443
    %v445 = vmul.f32 %v444, %v272
    %v446 = vmul.f32 %v444, %v277
    %v447 = vmul.f32 %v444, %v282
    %v448 = vmul.f32 %v444, %v287
    %v449 = vmul.f32 %v436, %v443
    %v450 = vmul.f32 %v449, %v312
    %v451 = vmul.f32 %v449, %v317
    %v452 = vmul.f32 %v449, %v322
    %v453 = vmul.f32 %v449, %v327
    %v454 = vadd.f32 %v445, %v450
    %v455 = vadd.f32 %v446, %v451
    %v456 = vadd.f32 %v447, %v452
    %v457 = vadd.f32 %v448, %v453
    %v458 = vmul.f32 %v439, %v443
    %v459 = vmul.f32 %v458, %v352
    %v460 = vmul.f32 %v458, %v357
    %v461 = vmul.f32 %v458, %v362
    %v462 = vmul.f32 %v458, %v367
    %v463 = vadd.f32 %v454, %v459
    %v464 = vadd.f32 %v455, %v460
    %v465 = vadd.f32 %v456, %v461
    %v466 = vadd.f32 %v457, %v462
    %v467 = vld [vmem:[%s2] sm:$0xff]
    %v468 = vld [vmem:[%s2 + $0x8] sm:$0xff]
    %v469 = vld [vmem:[%s2 + $0x10] sm:$0xff]
    %v470 = vld [vmem:[%s2 + $0x18] sm:$0xff]
    %vm471 = vcmask 261120
    %v473 = vsel %vm471, %v467, 0
    %v476 = vsel %vm471, %v468, 0
    %v479 = vsel %vm471, %v469, 0
    %v482 = vsel %vm471, %v470, 0
    %484 = vmatprep.subr.mxu0 0.0
    %485 = vmatpush1.msra.mxu0 %v463
    %486 = vmatprep.subr.mxu0 0.0
    %487 = vmatpush1.msra.mxu0 %v464
    %488 = vmatprep.subr.mxu0 0.0
    %489 = vmatpush1.msra.mxu0 %v465
    %490 = vmatprep.subr.mxu0 0.0
    %491 = vmatpush1.msra.mxu0 %v466
    %492 = vmatprep.subr.mxu0 0.0
    %493 = vmatpush1.msra.mxu0 0.0
    %494 = vmatprep.subr.mxu0 0.0
    %495 = vmatpush1.msra.mxu0 0.0
    %496 = vmatprep.subr.mxu0 0.0
    %497 = vmatpush1.msra.mxu0 0.0
    %498 = vmatprep.subr.mxu0 0.0
    %499 = vmatpush1.msra.mxu0 0.0
    %500 = vmatprep.subr.mxu0 0.0
    %501 = vmatpush1.msra.mxu0 0.0
    %502 = vmatprep.subr.mxu0 0.0
    %503 = vmatpush1.msra.mxu0 0.0
    %504 = vmatprep.subr.mxu0 0.0
    %505 = vmatpush1.msra.mxu0 0.0
    %506 = vmatprep.subr.mxu0 0.0
    %507 = vmatpush1.msra.mxu0 0.0
    %508 = vmatprep.subr.mxu0 0.0
    %509 = vmatpush1.msra.mxu0 0.0
    %510 = vmatprep.subr.mxu0 0.0
    %511 = vmatpush1.msra.mxu0 0.0
    %512 = vmatprep.subr.mxu0 0.0
    %513 = vmatpush1.msra.mxu0 0.0
    %514 = vmatprep.subr.mxu0 0.0
    %515 = vmatpush1.msra.mxu0 0.0
    %516 = vmatprep.subr.mxu0 0.0
    %517 = vmatpush1.msra.mxu0 0.0
    %518 = vmatprep.subr.mxu0 0.0
    %519 = vmatpush1.msra.mxu0 0.0
    %520 = vmatprep.subr.mxu0 0.0
    %521 = vmatpush1.msra.mxu0 0.0
    %522 = vmatprep.subr.mxu0 0.0
    %523 = vmatpush1.msra.mxu0 0.0
    %524 = vmatprep.subr.mxu0 0.0
    %525 = vmatpush1.msra.mxu0 0.0
    %526 = vmatprep.subr.mxu0 0.0
    %527 = vmatpush1.msra.mxu0 0.0
    %528 = vmatprep.subr.mxu0 0.0
    %529 = vmatpush1.msra.mxu0 0.0
    %530 = vmatprep.subr.mxu0 0.0
    %531 = vmatpush1.msra.mxu0 0.0
    %532 = vmatprep.subr.mxu0 0.0
    %533 = vmatpush1.msra.mxu0 0.0
    %534 = vmatprep.subr.mxu0 0.0
    %535 = vmatpush1.msra.mxu0 0.0
    %536 = vmatprep.subr.mxu0 0.0
    %537 = vmatpush1.msra.mxu0 0.0
    %538 = vmatprep.subr.mxu0 0.0
    %539 = vmatpush1.msra.mxu0 0.0
    %540 = vmatprep.subr.mxu0 0.0
    %541 = vmatpush1.msra.mxu0 0.0
    %542 = vmatprep.subr.mxu0 0.0
    %543 = vmatpush1.msra.mxu0 0.0
    %544 = vmatprep.subr.mxu0 0.0
    %545 = vmatpush1.msra.mxu0 0.0
    %546 = vmatprep.subr.mxu0 0.0
    %547 = vmatpush1.msra.mxu0 0.0
    %548 = vmatprep.mubr.f32.mxu0 0.0
    %549 = vmatmul.mubr.f32.gmra.mrb[0].mxu0 %v473
    %v550 = vpop.f32.mrb[0].mxu0
    %v551 = vadd.f32 %v372, %v550
    %v552 = vpop.f32.mrb[0].mxu0
    %553 = vmatprep.mubr.f32.mxu0 0.0
    %554 = vmatmul.mubr.f32.gmra.mrb[0].mxu0 %v476
    %v555 = vpop.f32.mrb[0].mxu0
    %v556 = vadd.f32 %v377, %v555
    %v557 = vpop.f32.mrb[0].mxu0
    %558 = vmatprep.mubr.f32.mxu0 0.0
    %559 = vmatmul.mubr.f32.gmra.mrb[0].mxu0 %v479
    %v560 = vpop.f32.mrb[0].mxu0
    %v561 = vadd.f32 %v382, %v560
    %v562 = vpop.f32.mrb[0].mxu0
    %563 = vmatprep.mubr.f32.mxu0 0.0
    %564 = vmatmul.mubr.f32.gmra.mrb[0].mxu0 %v482
    %v565 = vpop.f32.mrb[0].mxu0
    %v566 = vadd.f32 %v387, %v565
    %v567 = vpop.f32.mrb[0].mxu0
    %568 = vdwg.mxu0
    %v569 = vld [vmem:[%s3] sm:$0xff]
    %v570 = vld [vmem:[%s3 + $0x8] sm:$0xff]
    %v571 = vld [vmem:[%s3 + $0x10] sm:$0xff]
    %v572 = vld [vmem:[%s3 + $0x18] sm:$0xff]
    %574 = vset.pattern.permute.xlu0 0
    %575 = vperm.xlu0 %574, %v569
    %v576 = vpop.permute.xlu0 %575
    %579 = vset.pattern.permute.xlu0 0
    %580 = vperm.xlu0 %579, %v570
    %v581 = vpop.permute.xlu0 %580
    %584 = vset.pattern.permute.xlu0 0
    %585 = vperm.xlu0 %584, %v571
    %v586 = vpop.permute.xlu0 %585
    %589 = vset.pattern.permute.xlu0 0
    %590 = vperm.xlu0 %589, %v572
    %v591 = vpop.permute.xlu0 %590
    %v593 = vadd.f32 %v551, %v576
    %v594 = vadd.f32 %v556, %v581
    %v595 = vadd.f32 %v561, %v586
    %v596 = vadd.f32 %v566, %v591
    %vm597 = vcmp.ge.f32.partialorder %v593, 0.0
    %vm598 = vcmp.ge.f32.partialorder %v594, 0.0
    %vm599 = vcmp.ge.f32.partialorder %v595, 0.0
    %vm600 = vcmp.ge.f32.partialorder %v596, 0.0
    %v601 = vmul.f32 %v593, 0.01
    %v602 = vmul.f32 %v594, 0.01
    %v603 = vmul.f32 %v595, 0.01
    %v604 = vmul.f32 %v596, 0.01
    %v605 = vsel %vm597, %v593, %v601
    %v606 = vsel %vm598, %v594, %v602
    %v607 = vsel %vm599, %v595, %v603
    %v608 = vsel %vm600, %v596, %v604
    %v609 = vld [vmem:[%s4] sm:$0xff]
    %v610 = vld [vmem:[%s4 + $0x8] sm:$0xff]
    %v611 = vld [vmem:[%s4 + $0x10] sm:$0xff]
    %v612 = vld [vmem:[%s4 + $0x18] sm:$0xff]
    %v613 = vld [vmem:[%s5] sm:$0xff]
    %v614 = vld [vmem:[%s5 + $0x8] sm:$0xff]
    %v615 = vld [vmem:[%s5 + $0x10] sm:$0xff]
    %v616 = vld [vmem:[%s5 + $0x18] sm:$0xff]
    %618 = vset.pattern.permute.xlu0 0
    %619 = vperm.xlu0 %618, %v613
    %v620 = vpop.permute.xlu0 %619
    %623 = vset.pattern.permute.xlu0 0
    %624 = vperm.xlu0 %623, %v614
    %v625 = vpop.permute.xlu0 %624
    %628 = vset.pattern.permute.xlu0 0
    %629 = vperm.xlu0 %628, %v615
    %v630 = vpop.permute.xlu0 %629
    %633 = vset.pattern.permute.xlu0 0
    %634 = vperm.xlu0 %633, %v616
    %v635 = vpop.permute.xlu0 %634
    %v638 = vsel %vm471, %v609, 0
    %v641 = vsel %vm471, %v610, 0
    %v644 = vsel %vm471, %v611, 0
    %v647 = vsel %vm471, %v612, 0
    %649 = vmatprep.subr.mxu0 0.0
    %650 = vmatpush1.msra.mxu0 %v605
    %651 = vmatprep.subr.mxu0 0.0
    %652 = vmatpush1.msra.mxu0 %v606
    %653 = vmatprep.subr.mxu0 0.0
    %654 = vmatpush1.msra.mxu0 %v607
    %655 = vmatprep.subr.mxu0 0.0
    %656 = vmatpush1.msra.mxu0 %v608
    %657 = vmatprep.subr.mxu0 0.0
    %658 = vmatpush1.msra.mxu0 0.0
    %659 = vmatprep.subr.mxu0 0.0
    %660 = vmatpush1.msra.mxu0 0.0
    %661 = vmatprep.subr.mxu0 0.0
    %662 = vmatpush1.msra.mxu0 0.0
    %663 = vmatprep.subr.mxu0 0.0
    %664 = vmatpush1.msra.mxu0 0.0
    %665 = vmatprep.subr.mxu0 0.0
    %666 = vmatpush1.msra.mxu0 0.0
    %667 = vmatprep.subr.mxu0 0.0
    %668 = vmatpush1.msra.mxu0 0.0
    %669 = vmatprep.subr.mxu0 0.0
    %670 = vmatpush1.msra.mxu0 0.0
    %671 = vmatprep.subr.mxu0 0.0
    %672 = vmatpush1.msra.mxu0 0.0
    %673 = vmatprep.subr.mxu0 0.0
    %674 = vmatpush1.msra.mxu0 0.0
    %675 = vmatprep.subr.mxu0 0.0
    %676 = vmatpush1.msra.mxu0 0.0
    %677 = vmatprep.subr.mxu0 0.0
    %678 = vmatpush1.msra.mxu0 0.0
    %679 = vmatprep.subr.mxu0 0.0
    %680 = vmatpush1.msra.mxu0 0.0
    %681 = vmatprep.subr.mxu0 0.0
    %682 = vmatpush1.msra.mxu0 0.0
    %683 = vmatprep.subr.mxu0 0.0
    %684 = vmatpush1.msra.mxu0 0.0
    %685 = vmatprep.subr.mxu0 0.0
    %686 = vmatpush1.msra.mxu0 0.0
    %687 = vmatprep.subr.mxu0 0.0
    %688 = vmatpush1.msra.mxu0 0.0
    %689 = vmatprep.subr.mxu0 0.0
    %690 = vmatpush1.msra.mxu0 0.0
    %691 = vmatprep.subr.mxu0 0.0
    %692 = vmatpush1.msra.mxu0 0.0
    %693 = vmatprep.subr.mxu0 0.0
    %694 = vmatpush1.msra.mxu0 0.0
    %695 = vmatprep.subr.mxu0 0.0
    %696 = vmatpush1.msra.mxu0 0.0
    %697 = vmatprep.subr.mxu0 0.0
    %698 = vmatpush1.msra.mxu0 0.0
    %699 = vmatprep.subr.mxu0 0.0
    %700 = vmatpush1.msra.mxu0 0.0
    %701 = vmatprep.subr.mxu0 0.0
    %702 = vmatpush1.msra.mxu0 0.0
    %703 = vmatprep.subr.mxu0 0.0
    %704 = vmatpush1.msra.mxu0 0.0
    %705 = vmatprep.subr.mxu0 0.0
    %706 = vmatpush1.msra.mxu0 0.0
    %707 = vmatprep.subr.mxu0 0.0
    %708 = vmatpush1.msra.mxu0 0.0
    %709 = vmatprep.subr.mxu0 0.0
    %710 = vmatpush1.msra.mxu0 0.0
    %711 = vmatprep.subr.mxu0 0.0
    %712 = vmatpush1.msra.mxu0 0.0
    %713 = vmatprep.mubr.f32.mxu0 0.0
    %714 = vmatmul.mubr.f32.gmra.mrb[0].mxu0 %v638
    %v715 = vpop.f32.mrb[0].mxu0
    %v716 = vadd.f32 %v620, %v715
    %v717 = vpop.f32.mrb[0].mxu0
    %718 = vmatprep.mubr.f32.mxu0 0.0
    %719 = vmatmul.mubr.f32.gmra.mrb[0].mxu0 %v641
    %v720 = vpop.f32.mrb[0].mxu0
    %v721 = vadd.f32 %v625, %v720
    %v722 = vpop.f32.mrb[0].mxu0
    %723 = vmatprep.mubr.f32.mxu0 0.0
    %724 = vmatmul.mubr.f32.gmra.mrb[0].mxu0 %v644
    %v725 = vpop.f32.mrb[0].mxu0
    %v726 = vadd.f32 %v630, %v725
    %v727 = vpop.f32.mrb[0].mxu0
    %728 = vmatprep.mubr.f32.mxu0 0.0
    %729 = vmatmul.mubr.f32.gmra.mrb[0].mxu0 %v647
    %v730 = vpop.f32.mrb[0].mxu0
    %v731 = vadd.f32 %v635, %v730
    %v732 = vpop.f32.mrb[0].mxu0
    %733 = vdwg.mxu0
    %734 = vst [vmem:[#allocation2] sm:$0xff] %v716
    %735 = vst [vmem:[#allocation2 + $0x8] sm:$0xff] %v721
    %736 = vst [vmem:[#allocation2 + $0x10] sm:$0xff] %v726
    %737 = vst [vmem:[#allocation2 + $0x18] sm:$0xff] %v731
    // Predicated region
    $region26: #{tpu_custom_call.1} parent=1 // pred_check
      _
    $region27: #{tpu_custom_call.1} parent=1 // pred_check_branch
      %739 = sbr.rel (0) target = $region29
    $region28: #{tpu_custom_call.1} parent=1 // pred_region
      %s741 = ssub.s32 512, 512
      %742 = vsyncadd [#allocation3], %s741
      %s743 = sshll.u32 [#allocation2], 4
      %s744 = int_to_ptr.vmem [resolvable:$true] %s743
      %749 = dma.vmem_to_hbm [thread:$0]  %s744, 512, %s6, [#allocation3], 128, 128, 8
    $region29: #{tpu_custom_call.1} parent=1 // pred_fallthru
      _
    // Predicated region
    $region30: #{tpu_custom_call.1} parent=1 // pred_check
      _
    $region31: #{tpu_custom_call.1} parent=1 // pred_check_branch
      %751 = sbr.rel (0) target = $region33
    $region32: #{tpu_custom_call.1} parent=1 // pred_region
      %752 = dma.done [#allocation3], 512
    $region33: #{tpu_custom_call.1} parent=1 // pred_fallthru
      _
    %753 = vsyncpa [#allocation3], 1

</llo_original>
